<compile_context>
chip_gen: v7x
topology: tpu7x:2x2x1
jax: 0.10.0
libtpu: 0.0.40
codegen_flags: <defaults>
</compile_context>

<pallas_src>
from functools import partial

import jax
import jax.numpy as jnp
from jax.experimental import pallas as pl
from jax.experimental.pallas import tpu as pltpu


def _dueling_kernel(x_ref, w1b_ref, whb_ref, out_ref, *, d_in, h_dim):
    """x_ref:   [TILE_B, d_in]        activation tile
       w1b_ref: [d_in + 1, h_dim]     fc1 weight with bias as last row
       whb_ref: [h_dim + 1, 128]      fused (V|A) head weight, zero-padded to
                                      128 lanes, bias as last row
       out_ref: [TILE_B, 128]         lane-dense fused head output
    """
    x = x_ref[...]

    # hidden = relu(x @ W1 + b1)   (static ref slices: zero-cost views)
    w1 = w1b_ref[0:d_in, :]
    b1 = w1b_ref[d_in:d_in + 1, :]                       # [1, H]
    h = jnp.dot(x, w1, preferred_element_type=jnp.float32) + b1
    h = jnp.maximum(h, 0.0)

    # fused heads: [V | A | 0-pad] = h @ Wh + bh  -> one unmasked 128-lane store
    wh = whb_ref[0:h_dim, :]
    bh = whb_ref[h_dim:h_dim + 1, :]                     # [1, 128]
    out = jnp.dot(h, wh, preferred_element_type=jnp.float32) + bh
    out_ref[...] = out.astype(out_ref.dtype)


def dueling_dqn_forward(state, params, *, tile_b=512):
    """state: [B, D_in] float32. params: dict of weights/biases.
    Returns (V [B, 1], A [B, n_actions])."""
    w1, b1 = params["w1"], params["b1"]
    wv, bv = params["wv"], params["bv"]
    wa, ba = params["wa"], params["ba"]

    B, D_in = state.shape
    H = w1.shape[1]
    n_actions = wa.shape[1]
    n_head = 1 + n_actions
    LANE = 128
    n_pad = pl.cdiv(n_head, LANE) * LANE                 # lane-dense head width

    # ---- operand packing (7 refs -> 3) -------------------------------------
    # fc1 weight + bias as one [D_in+1, H] operand.
    w1b = jnp.concatenate([w1, b1.reshape(1, H)], axis=0).astype(jnp.float32)

    # Fused head: [Wv | Wa] padded with zero columns to 128 lanes; bias row last.
    w_head = jnp.concatenate([wv, wa], axis=1)                      # [H, n_head]
    b_head = jnp.concatenate([bv, ba], axis=0).reshape(1, n_head)   # [1, n_head]
    w_head = jnp.pad(w_head, ((0, 0), (0, n_pad - n_head)))
    b_head = jnp.pad(b_head, ((0, 0), (0, n_pad - n_head)))
    whb = jnp.concatenate([w_head, b_head], axis=0).astype(jnp.float32)  # [H+1, n_pad]

    # ---- batch tiling -------------------------------------------------------
    # Round batch up to a sublane multiple; stream activations, weights resident.
    tb = min(tile_b, max(8, pl.cdiv(B, 8) * 8))
    n_tiles = pl.cdiv(B, tb)
    b_pad = n_tiles * tb
    x = state if b_pad == B else jnp.pad(state, ((0, b_pad - B), (0, 0)))
    x = x.astype(jnp.float32)

    out = pl.pallas_call(
        partial(_dueling_kernel, d_in=D_in, h_dim=H),
        out_shape=jax.ShapeDtypeStruct((b_pad, n_pad), jnp.float32),
        grid=(n_tiles,),
        in_specs=[
            pl.BlockSpec((tb, D_in), lambda i: (i, 0)),        # activations stream
            pl.BlockSpec((D_in + 1, H), lambda i: (0, 0)),     # fc1 (resident)
            pl.BlockSpec((H + 1, n_pad), lambda i: (0, 0)),    # fused head (resident)
        ],
        out_specs=pl.BlockSpec((tb, n_pad), lambda i: (i, 0)),
        compiler_params=pltpu.CompilerParams(
            dimension_semantics=("parallel",),                 # 2 TCs on v7x
        ),
    )(x, w1b, whb)

    out = out[:B]
    V = out[:, :1]
    A = out[:, 1:n_head]
    return V, A


def init_params(key, input_dim, fc1_dims, n_actions):
    """Deterministic init mimicking PyTorch nn.Linear default
    (uniform(-1/sqrt(fan_in), 1/sqrt(fan_in)))."""
    ks = jax.random.split(key, 6)

    def linear(kw, kb, fan_in, fan_out):
        bound = 1.0 / jnp.sqrt(fan_in)
        w = jax.random.uniform(kw, (fan_in, fan_out), jnp.float32, -bound, bound)
        b = jax.random.uniform(kb, (fan_out,), jnp.float32, -bound, bound)
        return w, b

    w1, b1 = linear(ks[0], ks[1], input_dim, fc1_dims)
    wv, bv = linear(ks[2], ks[3], fc1_dims, 1)
    wa, ba = linear(ks[4], ks[5], fc1_dims, n_actions)
    return {"w1": w1, "b1": b1, "wv": wv, "bv": bv, "wa": wa, "ba": ba}


if __name__ == "__main__":
    # Small shapes consistent with the module:
    # input_dims = [32], fc1_dims = 64, n_actions = 4, batch = 8
    batch, input_dim, fc1_dims, n_actions = 8, 32, 64, 4

    key = jax.random.PRNGKey(0)
    k_params, k_state = jax.random.split(key)
    params = init_params(k_params, input_dim, fc1_dims, n_actions)
    state = jax.random.normal(k_state, (batch, input_dim), jnp.float32)

    V, A = dueling_dqn_forward(state, params)
    V, A = jax.block_until_ready(V), jax.block_until_ready(A)

    # Pure-JAX reference check
    h_ref = jnp.maximum(state @ params["w1"] + params["b1"], 0.0)
    V_ref = h_ref @ params["wv"] + params["bv"]
    A_ref = h_ref @ params["wa"] + params["ba"]
    assert V.shape == (batch, 1) and A.shape == (batch, n_actions)
    assert jnp.allclose(V, V_ref, atol=1e-5), "V mismatch"
    assert jnp.allclose(A, A_ref, atol=1e-5), "A mismatch"

    print("KERNEL_OK")
</pallas_src>

<mosaic_0001>
module attributes {stable_mosaic.version = 11 : i64} {
  func.func @_dueling_kernel(%arg0: i32, %arg1: memref<8x32xf32, #tpu.memory_space<vmem>>, %arg2: memref<33x64xf32, #tpu.memory_space<vmem>>, %arg3: memref<65x128xf32, #tpu.memory_space<vmem>>, %arg4: memref<8x128xf32, #tpu.memory_space<vmem>>) attributes {dimension_semantics = [#tpu.dimension_semantics<parallel>], iteration_bounds = array<i64: 1>, scalar_prefetch = 0 : i64, scratch_operands = 0 : i64, tpu.core_type = #tpu.core_type<tc>, window_params = [{transform_indices = @transform_0, window_bounds = array<i64: 8, 32>}, {pipeline_mode = #tpu.pipeline_mode<synchronous>, transform_indices = @transform_1, window_bounds = array<i64: 33, 64>}, {pipeline_mode = #tpu.pipeline_mode<synchronous>, transform_indices = @transform_2, window_bounds = array<i64: 65, 128>}, {transform_indices = @transform_3, window_bounds = array<i64: 8, 128>}]} {
    %c0 = arith.constant 0 : index
    %c0_0 = arith.constant 0 : index
    %0 = vector.load %arg1[%c0, %c0_0] : memref<8x32xf32, #tpu.memory_space<vmem>>, vector<8x32xf32>
    %c0_1 = arith.constant 0 : index
    %c0_2 = arith.constant 0 : index
    %1 = vector.load %arg2[%c0_1, %c0_2] : memref<33x64xf32, #tpu.memory_space<vmem>>, vector<32x64xf32>
    %c32 = arith.constant 32 : index
    %c0_3 = arith.constant 0 : index
    %2 = vector.load %arg2[%c32, %c0_3] : memref<33x64xf32, #tpu.memory_space<vmem>>, vector<1x64xf32>
    %cst = arith.constant dense<0.000000e+00> : vector<8x64xf32>
    %3 = tpu.matmul %0, %1, %cst {dimension_numbers = #tpu.dot_dimension_numbers<[1], [0], [0], [1], [0, 0, 1, 1], [], []>} : vector<8x32xf32>, vector<32x64xf32>, vector<8x64xf32> -> vector<8x64xf32>
    %4 = vector.broadcast %2 : vector<1x64xf32> to vector<8x64xf32>
    %5 = arith.addf %3, %4 : vector<8x64xf32>
    %cst_4 = arith.constant 0.000000e+00 : f32
    %6 = vector.broadcast %cst_4 : f32 to vector<8x64xf32>
    %7 = arith.maximumf %5, %6 : vector<8x64xf32>
    %c0_5 = arith.constant 0 : index
    %c0_6 = arith.constant 0 : index
    %8 = vector.load %arg3[%c0_5, %c0_6] : memref<65x128xf32, #tpu.memory_space<vmem>>, vector<64x128xf32>
    %c64 = arith.constant 64 : index
    %c0_7 = arith.constant 0 : index
    %9 = vector.load %arg3[%c64, %c0_7] : memref<65x128xf32, #tpu.memory_space<vmem>>, vector<1x128xf32>
    %cst_8 = arith.constant dense<0.000000e+00> : vector<8x128xf32>
    %10 = tpu.matmul %7, %8, %cst_8 {dimension_numbers = #tpu.dot_dimension_numbers<[1], [0], [0], [1], [0, 0, 1, 1], [], []>} : vector<8x64xf32>, vector<64x128xf32>, vector<8x128xf32> -> vector<8x128xf32>
    %11 = vector.broadcast %9 : vector<1x128xf32> to vector<8x128xf32>
    %12 = arith.addf %10, %11 : vector<8x128xf32>
    %c0_9 = arith.constant 0 : index
    %c0_10 = arith.constant 0 : index
    %13 = vector.load %arg4[%c0_9, %c0_10] : memref<8x128xf32, #tpu.memory_space<vmem>>, vector<8x128xf32>
    tpu.vector_store %arg4[%c0_9, %c0_10], %12 {strides = array<i32>} : memref<8x128xf32, #tpu.memory_space<vmem>>, vector<8x128xf32>,
    return
  }
  func.func @transform_0(%arg0: i32) -> (i32, i32) {
    %c0_i32 = arith.constant 0 : i32
    %c0_i32_0 = arith.constant 0 : i32
    return %arg0, %c0_i32 : i32, i32
  }
  func.func @transform_1(%arg0: i32) -> (i32, i32) {
    %c0_i32 = arith.constant 0 : i32
    %c0_i32_0 = arith.constant 0 : i32
    %c0_i32_1 = arith.constant 0 : i32
    return %c0_i32, %c0_i32_0 : i32, i32
  }
  func.func @transform_2(%arg0: i32) -> (i32, i32) {
    %c0_i32 = arith.constant 0 : i32
    %c0_i32_0 = arith.constant 0 : i32
    %c0_i32_1 = arith.constant 0 : i32
    return %c0_i32, %c0_i32_0 : i32, i32
  }
  func.func @transform_3(%arg0: i32) -> (i32, i32) {
    %c0_i32 = arith.constant 0 : i32
    %c0_i32_0 = arith.constant 0 : i32
    return %arg0, %c0_i32 : i32, i32
  }
}

</mosaic_0001>

<llo_original>
// kernel: tpu_custom_call.1
$region0: #{tpu_custom_call.1}
  #allocation0 [shape = 'u32[]', space=smem, size = 0x4, offset = 0x4, fixed_abs, tag = 'smem constant byte address 0x4 - core index']
  #allocation1 [shape = 'u32[144,128]{1,0:T(1,128)}', space=vmem, size = 0x12000, scoped, tag = 'internal scratch']
  %s0 = inlined_call_operand.hbm [shape: f32[8,32], index: 0, kind: input, shape index: {}]
  %s1 = inlined_call_operand.hbm [shape: f32[33,64], index: 1, kind: input, shape index: {}]
  %s2 = inlined_call_operand.hbm [shape: f32[65,128], index: 2, kind: input, shape index: {}]
  %s3 = inlined_call_operand.hbm [shape: f32[8,128], index: 3, kind: output, shape index: {}]
  %s4 = sld [smem:[#allocation0]]
  $region34: #{tpu_custom_call.1} parent=0
    _
  %s6 = ssub.s32 1, %s4
  %s7 = scalar_select 0, %s6, %s4
  $region1: #{tpu_custom_call.1} parent=0
    #allocation2 [shape = 'u8[4096]{0}', space=vmem, size = 0x1000, scoped, tag = 'input window, operand 0, single buffered']
    #allocation3 [shape = 's32[1]{0}', space=sflag, size = 0x4, scoped, tag = 'scoped memory for tpu_custom_call.1']
    #allocation4 [shape = 's32[1]{0}', space=sflag, size = 0x4, scoped, tag = 'scoped memory for tpu_custom_call.1']
    #allocation5 [shape = 'u8[20480]{0}', space=vmem, size = 0x5000, scoped, tag = 'input window, operand 1, single buffered']
    #allocation6 [shape = 's32[1]{0}', space=sflag, size = 0x4, scoped, tag = 'scoped memory for tpu_custom_call.1']
    #allocation7 [shape = 'u8[36864]{0}', space=vmem, size = 0x9000, scoped, tag = 'input window, operand 2, single buffered']
    #allocation8 [shape = 'u8[4096]{0}', space=vmem, size = 0x1000, scoped, tag = 'output window, operand 0, single buffered']
    %8 = vsyncpa [#allocation3], 0
    %9 = vsyncpa [#allocation6], 0
    %10 = vsyncpa [#allocation4], 0
    // Predicated region
    $region2: #{tpu_custom_call.1} parent=1 // pred_check
      _
    $region3: #{tpu_custom_call.1} parent=1 // pred_check_branch
      %12 = sbr.rel (0) target = $region5
    $region4: #{tpu_custom_call.1} parent=1 // pred_region
      %s14 = ssub.s32 128, 128
      %15 = vsyncadd [#allocation3], %s14
      %s17 = sshll.u32 [#allocation2], 4
      %s18 = int_to_ptr.vmem [resolvable:$true] %s17
      %20 = dma.hbm_to_vmem [thread:$0]  %s0, 128, %s18, [#allocation3]
    $region5: #{tpu_custom_call.1} parent=1 // pred_fallthru
      _
    // Predicated region
    $region6: #{tpu_custom_call.1} parent=1 // pred_check
      _
    $region7: #{tpu_custom_call.1} parent=1 // pred_check_branch
      %22 = sbr.rel (0) target = $region9
    $region8: #{tpu_custom_call.1} parent=1 // pred_region
      %s24 = ssub.s32 640, 640
      %25 = vsyncadd [#allocation6], %s24
      %s26 = sshll.u32 [#allocation5], 4
      %s27 = int_to_ptr.vmem [resolvable:$true] %s26
      %32 = dma.hbm_to_vmem [thread:$0]  %s1, 640, %s27, [#allocation6], 128, 128, 8
    $region9: #{tpu_custom_call.1} parent=1 // pred_fallthru
      _
    // Predicated region
    $region10: #{tpu_custom_call.1} parent=1 // pred_check
      _
    $region11: #{tpu_custom_call.1} parent=1 // pred_check_branch
      %34 = sbr.rel (0) target = $region13
    $region12: #{tpu_custom_call.1} parent=1 // pred_region
      %s36 = ssub.s32 1152, 1152
      %37 = vsyncadd [#allocation6], %s36
      %s38 = sshll.u32 [#allocation7], 4
      %s39 = int_to_ptr.vmem [resolvable:$true] %s38
      %44 = dma.hbm_to_vmem [thread:$0]  %s2, 1152, %s39, [#allocation6], 128, 128, 8
    $region13: #{tpu_custom_call.1} parent=1 // pred_fallthru
      _
    // Predicated region
    $region14: #{tpu_custom_call.1} parent=1 // pred_check
      _
    $region15: #{tpu_custom_call.1} parent=1 // pred_check_branch
      %46 = sbr.rel (0) target = $region17
    $region16: #{tpu_custom_call.1} parent=1 // pred_region
      %47 = dma.done [#allocation3], 128
    $region17: #{tpu_custom_call.1} parent=1 // pred_fallthru
      _
    // Predicated region
    $region18: #{tpu_custom_call.1} parent=1 // pred_check
      _
    $region19: #{tpu_custom_call.1} parent=1 // pred_check_branch
      %49 = sbr.rel (0) target = $region21
    $region20: #{tpu_custom_call.1} parent=1 // pred_region
      %50 = dma.done [#allocation6], 640
    $region21: #{tpu_custom_call.1} parent=1 // pred_fallthru
      _
    // Predicated region
    $region22: #{tpu_custom_call.1} parent=1 // pred_check
      _
    $region23: #{tpu_custom_call.1} parent=1 // pred_check_branch
      %52 = sbr.rel (0) target = $region25
    $region24: #{tpu_custom_call.1} parent=1 // pred_region
      %53 = dma.done [#allocation6], 1152
    $region25: #{tpu_custom_call.1} parent=1 // pred_fallthru
      _
    %v54 = vld [vmem:[#allocation2] sm:$0xff]
    %v55 = vld [vmem:[#allocation5] sm:$0xff]
    %v56 = vld [vmem:[#allocation5 + $0x8] sm:$0xff]
    %v57 = vld [vmem:[#allocation5 + $0x10] sm:$0xff]
    %v58 = vld [vmem:[#allocation5 + $0x18] sm:$0xff]
    %v59 = vld [vmem:[#allocation5 + $0x20] sm:$0x1]
    %v60 = vlaneseq
    %v61 = vshrl.u32 %v60, 7
    %v62 = vsub.s32 0, %v61
    %v63 = vrot.slane %v59, %v62
    %vm64 = vcmask 261120
    %v66 = vsel %vm64, %v54, 0
    %68 = vmatprep.subr.mxu0 0.0
    %69 = vmatpush1.msra.mxu0 %v55
    %70 = vmatprep.subr.mxu0 0.0
    %71 = vmatpush1.msra.mxu0 %v56
    %72 = vmatprep.subr.mxu0 0.0
    %73 = vmatpush1.msra.mxu0 %v57
    %74 = vmatprep.subr.mxu0 0.0
    %75 = vmatpush1.msra.mxu0 %v58
    %76 = vmatprep.subr.mxu0 0.0
    %77 = vmatpush1.msra.mxu0 0.0
    %78 = vmatprep.subr.mxu0 0.0
    %79 = vmatpush1.msra.mxu0 0.0
    %80 = vmatprep.subr.mxu0 0.0
    %81 = vmatpush1.msra.mxu0 0.0
    %82 = vmatprep.subr.mxu0 0.0
    %83 = vmatpush1.msra.mxu0 0.0
    %84 = vmatprep.subr.mxu0 0.0
    %85 = vmatpush1.msra.mxu0 0.0
    %86 = vmatprep.subr.mxu0 0.0
    %87 = vmatpush1.msra.mxu0 0.0
    %88 = vmatprep.subr.mxu0 0.0
    %89 = vmatpush1.msra.mxu0 0.0
    %90 = vmatprep.subr.mxu0 0.0
    %91 = vmatpush1.msra.mxu0 0.0
    %92 = vmatprep.subr.mxu0 0.0
    %93 = vmatpush1.msra.mxu0 0.0
    %94 = vmatprep.subr.mxu0 0.0
    %95 = vmatpush1.msra.mxu0 0.0
    %96 = vmatprep.subr.mxu0 0.0
    %97 = vmatpush1.msra.mxu0 0.0
    %98 = vmatprep.subr.mxu0 0.0
    %99 = vmatpush1.msra.mxu0 0.0
    %100 = vmatprep.subr.mxu0 0.0
    %101 = vmatpush1.msra.mxu0 0.0
    %102 = vmatprep.subr.mxu0 0.0
    %103 = vmatpush1.msra.mxu0 0.0
    %104 = vmatprep.subr.mxu0 0.0
    %105 = vmatpush1.msra.mxu0 0.0
    %106 = vmatprep.subr.mxu0 0.0
    %107 = vmatpush1.msra.mxu0 0.0
    %108 = vmatprep.subr.mxu0 0.0
    %109 = vmatpush1.msra.mxu0 0.0
    %110 = vmatprep.subr.mxu0 0.0
    %111 = vmatpush1.msra.mxu0 0.0
    %112 = vmatprep.subr.mxu0 0.0
    %113 = vmatpush1.msra.mxu0 0.0
    %114 = vmatprep.subr.mxu0 0.0
    %115 = vmatpush1.msra.mxu0 0.0
    %116 = vmatprep.subr.mxu0 0.0
    %117 = vmatpush1.msra.mxu0 0.0
    %118 = vmatprep.subr.mxu0 0.0
    %119 = vmatpush1.msra.mxu0 0.0
    %120 = vmatprep.subr.mxu0 0.0
    %121 = vmatpush1.msra.mxu0 0.0
    %122 = vmatprep.subr.mxu0 0.0
    %123 = vmatpush1.msra.mxu0 0.0
    %124 = vmatprep.subr.mxu0 0.0
    %125 = vmatpush1.msra.mxu0 0.0
    %126 = vmatprep.subr.mxu0 0.0
    %127 = vmatpush1.msra.mxu0 0.0
    %128 = vmatprep.subr.mxu0 0.0
    %129 = vmatpush1.msra.mxu0 0.0
    %130 = vmatprep.subr.mxu0 0.0
    %131 = vmatpush1.msra.mxu0 0.0
    %132 = vmatprep.mubr.f32.mxu0 0.0
    %133 = vmatmul.mubr.f32.gmra.mrb[0].mxu0 %v66
    %v134 = vpop.f32.mrb[0].mxu0
    %v135 = vadd.f32 %v63, %v134
    %v136 = vpop.f32.mrb[0].mxu0
    %137 = vdwg.mxu0
    %v138 = vmax.f32 %v135, 0.0
    %v139 = vld [vmem:[#allocation7] sm:$0xff]
    %v140 = vld [vmem:[#allocation7 + $0x8] sm:$0xff]
    %v141 = vld [vmem:[#allocation7 + $0x10] sm:$0xff]
    %v142 = vld [vmem:[#allocation7 + $0x18] sm:$0xff]
    %v143 = vld [vmem:[#allocation7 + $0x20] sm:$0xff]
    %v144 = vld [vmem:[#allocation7 + $0x28] sm:$0xff]
    %v145 = vld [vmem:[#allocation7 + $0x30] sm:$0xff]
    %v146 = vld [vmem:[#allocation7 + $0x38] sm:$0xff]
    %v147 = vld [vmem:[#allocation7 + $0x40] sm:$0x1]
    %v148 = vlaneseq
    %v149 = vshrl.u32 %v148, 7
    %v150 = vsub.s32 0, %v149
    %v151 = vrot.slane %v147, %v150
    %vm152 = vcmask 523264
    %v154 = vsel %vm152, %v138, 0
    %156 = vmatprep.subr.mxu0 0.0
    %157 = vmatpush1.msra.mxu0 %v139
    %158 = vmatprep.subr.mxu0 0.0
    %159 = vmatpush1.msra.mxu0 %v140
    %160 = vmatprep.subr.mxu0 0.0
    %161 = vmatpush1.msra.mxu0 %v141
    %162 = vmatprep.subr.mxu0 0.0
    %163 = vmatpush1.msra.mxu0 %v142
    %164 = vmatprep.subr.mxu0 0.0
    %165 = vmatpush1.msra.mxu0 %v143
    %166 = vmatprep.subr.mxu0 0.0
    %167 = vmatpush1.msra.mxu0 %v144
    %168 = vmatprep.subr.mxu0 0.0
    %169 = vmatpush1.msra.mxu0 %v145
    %170 = vmatprep.subr.mxu0 0.0
    %171 = vmatpush1.msra.mxu0 %v146
    %172 = vmatprep.subr.mxu0 0.0
    %173 = vmatpush1.msra.mxu0 0.0
    %174 = vmatprep.subr.mxu0 0.0
    %175 = vmatpush1.msra.mxu0 0.0
    %176 = vmatprep.subr.mxu0 0.0
    %177 = vmatpush1.msra.mxu0 0.0
    %178 = vmatprep.subr.mxu0 0.0
    %179 = vmatpush1.msra.mxu0 0.0
    %180 = vmatprep.subr.mxu0 0.0
    %181 = vmatpush1.msra.mxu0 0.0
    %182 = vmatprep.subr.mxu0 0.0
    %183 = vmatpush1.msra.mxu0 0.0
    %184 = vmatprep.subr.mxu0 0.0
    %185 = vmatpush1.msra.mxu0 0.0
    %186 = vmatprep.subr.mxu0 0.0
    %187 = vmatpush1.msra.mxu0 0.0
    %188 = vmatprep.subr.mxu0 0.0
    %189 = vmatpush1.msra.mxu0 0.0
    %190 = vmatprep.subr.mxu0 0.0
    %191 = vmatpush1.msra.mxu0 0.0
    %192 = vmatprep.subr.mxu0 0.0
    %193 = vmatpush1.msra.mxu0 0.0
    %194 = vmatprep.subr.mxu0 0.0
    %195 = vmatpush1.msra.mxu0 0.0
    %196 = vmatprep.subr.mxu0 0.0
    %197 = vmatpush1.msra.mxu0 0.0
    %198 = vmatprep.subr.mxu0 0.0
    %199 = vmatpush1.msra.mxu0 0.0
    %200 = vmatprep.subr.mxu0 0.0
    %201 = vmatpush1.msra.mxu0 0.0
    %202 = vmatprep.subr.mxu0 0.0
    %203 = vmatpush1.msra.mxu0 0.0
    %204 = vmatprep.subr.mxu0 0.0
    %205 = vmatpush1.msra.mxu0 0.0
    %206 = vmatprep.subr.mxu0 0.0
    %207 = vmatpush1.msra.mxu0 0.0
    %208 = vmatprep.subr.mxu0 0.0
    %209 = vmatpush1.msra.mxu0 0.0
    %210 = vmatprep.subr.mxu0 0.0
    %211 = vmatpush1.msra.mxu0 0.0
    %212 = vmatprep.subr.mxu0 0.0
    %213 = vmatpush1.msra.mxu0 0.0
    %214 = vmatprep.subr.mxu0 0.0
    %215 = vmatpush1.msra.mxu0 0.0
    %216 = vmatprep.subr.mxu0 0.0
    %217 = vmatpush1.msra.mxu0 0.0
    %218 = vmatprep.subr.mxu0 0.0
    %219 = vmatpush1.msra.mxu0 0.0
    %220 = vmatprep.mubr.f32.mxu0 0.0
    %221 = vmatmul.mubr.f32.gmra.mrb[0].mxu0 %v154
    %v222 = vpop.f32.mrb[0].mxu0
    %v223 = vadd.f32 %v151, %v222
    %v224 = vpop.f32.mrb[0].mxu0
    %225 = vdwg.mxu0
    %226 = vst [vmem:[#allocation8] sm:$0xff] %v223
    // Predicated region
    $region26: #{tpu_custom_call.1} parent=1 // pred_check
      _
    $region27: #{tpu_custom_call.1} parent=1 // pred_check_branch
      %228 = sbr.rel (0) target = $region29
    $region28: #{tpu_custom_call.1} parent=1 // pred_region
      %s230 = ssub.s32 128, 128
      %231 = vsyncadd [#allocation4], %s230
      %s233 = sshll.u32 [#allocation8], 4
      %s234 = int_to_ptr.vmem [resolvable:$true] %s233
      %236 = dma.vmem_to_hbm [thread:$0]  %s234, 128, %s3, [#allocation4]
    $region29: #{tpu_custom_call.1} parent=1 // pred_fallthru
      _
    // Predicated region
    $region30: #{tpu_custom_call.1} parent=1 // pred_check
      _
    $region31: #{tpu_custom_call.1} parent=1 // pred_check_branch
      %238 = sbr.rel (0) target = $region33
    $region32: #{tpu_custom_call.1} parent=1 // pred_region
      %239 = dma.done [#allocation4], 128
    $region33: #{tpu_custom_call.1} parent=1 // pred_fallthru
      _
    %240 = vsyncpa [#allocation3], 1
    %241 = vsyncpa [#allocation6], 1
    %242 = vsyncpa [#allocation4], 1

</llo_original>
